<compile_context>
chip_gen: v5e
topology: v5e:2x2
jax: 0.10.0
libtpu: 0.0.40
codegen_flags: <defaults>
</compile_context>

<pallas_src>
import numpy as np
import jax
import jax.numpy as jnp
from jax import lax
from jax.experimental import pallas as pl
from jax.experimental.pallas import tpu as pltpu


def _patch_embed_kernel(x_ref, w_ref, pos_ref, o_ref):
    # x_ref:   (TB, T, K)  patch pixels; token 0 of every batch element is a
    #                      zero row (cls slot), tokens 1..N are patches.
    # w_ref:   (K, E)      flattened conv weight               (VMEM-resident)
    # pos_ref: (T, E) f32  [cls_tok+pos[0] ; pos[1:]+conv_bias](VMEM-resident)
    # o_ref:   (TB, T, E)  output tokens
    tb = x_ref.shape[0]
    w = w_ref[...]          # hoisted: loaded once per grid step
    pos = pos_ref[...]      # f32
    for b in range(tb):     # static unroll; each slice is a 2-D MXU matmul
        proj = jnp.dot(x_ref[b], w, preferred_element_type=jnp.float32)
        # zero cls row * W == 0, so pos row 0 alone reproduces cls + pos[0];
        # rows 1..N get conv bias + pos.  Single aligned (T, E) store.
        o_ref[b] = (proj + pos).astype(o_ref.dtype)


def patch_embed(x, conv_w, conv_b, cls_token, pos_embed, patch_size, *,
                block_rows=2048, matmul_dtype=None, out_dtype=None,
                single_buffer_residents=True):
    """x: (B, H, W). Returns (B, num_patches + 1, embed_dim)."""
    B, H, W = x.shape
    P = patch_size
    E = conv_w.shape[0]
    Hp, Wp = H // P, W // P
    N = Hp * Wp
    K = P * P
    T = N + 1
    out_dtype = x.dtype if out_dtype is None else out_dtype

    # --- patchify (B,H,W) -> (B,N,K) matching Conv2d(kernel=P, stride=P)
    # weight layout, then prepend a zero row per batch element for the cls
    # slot so the kernel writes one aligned full block per batch element.
    patches = x.reshape(B, Hp, P, Wp, P)
    patches = jnp.transpose(patches, (0, 1, 3, 2, 4)).reshape(B, N, K)
    patches = jnp.concatenate(
        [jnp.zeros((B, 1, K), patches.dtype), patches], axis=1)      # (B,T,K)

    # conv weight (E,1,P,P) -> (K,E)
    w2d = conv_w.reshape(E, K).T

    # Fused pos table (T,E): row 0 = cls_token + pos_embed[0];
    # rows 1..N = pos_embed[1:] + conv bias.  Kept in f32 (v5e-safe epilogue).
    pos2d = pos_embed.reshape(T, E).astype(jnp.float32)
    pos_tab = jnp.concatenate(
        [pos2d[:1] + cls_token.reshape(1, E).astype(jnp.float32),
         pos2d[1:] + conv_b.reshape(1, E).astype(jnp.float32)], axis=0)

    if matmul_dtype is not None:  # e.g. jnp.bfloat16 at real ViT scale
        patches = patches.astype(matmul_dtype)
        w2d = w2d.astype(matmul_dtype)

    # Batch tile: enough token rows per step to amortize the ~0.35 us/step
    # pipeline overhead, but clamped so grid >= 2 (both v7x TensorCores busy,
    # DMA/compute overlap restored).
    tb = max(1, min(B, block_rows // max(T, 1)))
    tb = min(tb, max(1, B // 2))
    while B % tb:
        tb -= 1
    grid = (B // tb,)

    # Explicit VMEM budget: double-buffered streamed blocks + resident tables.
    in_bytes = tb * T * K * patches.dtype.itemsize
    out_bytes = tb * T * E * np.dtype(out_dtype).itemsize
    res_bytes = K * E * w2d.dtype.itemsize + T * E * 4
    n_res_buf = 1 if single_buffer_residents else 2
    needed = 2 * (in_bytes + out_bytes) + n_res_buf * res_bytes
    vmem_limit = int(min(max(2 * needed + (4 << 20), 16 << 20), 64 << 20))

    def build(resident_mode):
        res_kwargs = {} if resident_mode is None else dict(
            pipeline_mode=resident_mode)
        return pl.pallas_call(
            _patch_embed_kernel,
            out_shape=jax.ShapeDtypeStruct((B, T, E), out_dtype),
            grid_spec=pltpu.PrefetchScalarGridSpec(
                num_scalar_prefetch=0,
                grid=grid,
                in_specs=[
                    pl.BlockSpec((tb, T, K), lambda i: (i, 0, 0)),    # patches
                    pl.BlockSpec((K, E), lambda i: (0, 0), **res_kwargs),  # W
                    pl.BlockSpec((T, E), lambda i: (0, 0), **res_kwargs),  # pos
                ],
                out_specs=pl.BlockSpec((tb, T, E), lambda i: (i, 0, 0)),
            ),
            compiler_params=pltpu.CompilerParams(
                dimension_semantics=("parallel",),
                vmem_limit_bytes=vmem_limit,
            ),
        )

    if single_buffer_residents:
        try:
            return build(pl.Buffered(1))(patches, w2d, pos_tab)
        except Exception:
            pass  # this JAX build rejects buffer_count=1; use default buffers
    return build(None)(patches, w2d, pos_tab)


def _reference(x, conv_w, conv_b, cls_token, pos_embed, patch_size):
    """Pure-JAX reference mirroring the PyTorch forward (for verification)."""
    B = x.shape[0]
    E = conv_w.shape[0]
    x4 = x[:, None, :, :]  # unsqueeze(1) -> NCHW
    y = lax.conv_general_dilated(
        x4, conv_w,
        window_strides=(patch_size, patch_size),
        padding="VALID",
        dimension_numbers=("NCHW", "OIHW", "NCHW"),
    ) + conv_b.reshape(1, E, 1, 1)
    y = y.reshape(B, E, -1)                 # flatten(2)
    y = jnp.transpose(y, (0, 2, 1))         # transpose(1, 2)
    cls = jnp.broadcast_to(cls_token.reshape(1, 1, E), (B, 1, E))
    y = jnp.concatenate([cls, y], axis=1)
    return y + pos_embed                    # Identity norm, dropout p=0


if __name__ == "__main__":
    # Small config consistent with the module (in_channel forced to 1 by
    # unsqueeze(1)).  E=128 keeps the output lane-dense; B=4 with the
    # grid>=2 clamp gives tb=2 and a 2-step grid so the batch-tiled path
    # (including the unaligned T=65 token axis) is exercised.
    B, H, W = 4, 32, 32
    P = 4
    E = 128
    seq_size = H * W                        # 1024
    num_patches = seq_size // (P * P)       # 64

    key = jax.random.PRNGKey(0)
    k_x, k_w, k_b, k_cls, k_pos = jax.random.split(key, 5)

    x = jax.random.normal(k_x, (B, H, W), dtype=jnp.float32)
    conv_w = jax.random.normal(k_w, (E, 1, P, P), dtype=jnp.float32) * 0.05
    conv_b = jax.random.normal(k_b, (E,), dtype=jnp.float32) * 0.05
    # In __init__ these start as zeros; use small random values so the add
    # paths are actually exercised.
    cls_token = jax.random.normal(k_cls, (1, 1, E), dtype=jnp.float32) * 0.02
    pos_embed = jax.random.normal(
        k_pos, (1, num_patches + 1, E), dtype=jnp.float32) * 0.02

    out = patch_embed(x, conv_w, conv_b, cls_token, pos_embed, P)
    out = jax.block_until_ready(out)

    ref = _reference(x, conv_w, conv_b, cls_token, pos_embed, P)
    assert out.shape == (B, num_patches + 1, E), out.shape
    assert jnp.allclose(out, ref, atol=1e-4, rtol=1e-4), "mismatch vs reference"

    # TODO(synk): at real ViT scale, call with matmul_dtype=jnp.bfloat16 (and
    # bf16 out_dtype if the consumer allows) and a looser-tolerance check.

    print("KERNEL_OK")
</pallas_src>

<mosaic_0001>
module attributes {stable_mosaic.version = 11 : i64} {
  func.func @_patch_embed_kernel(%arg0: i32, %arg1: memref<2x65x16xf32, #tpu.memory_space<vmem>>, %arg2: memref<16x128xf32, #tpu.memory_space<vmem>>, %arg3: memref<65x128xf32, #tpu.memory_space<vmem>>, %arg4: memref<2x65x128xf32, #tpu.memory_space<vmem>>) attributes {dimension_semantics = [#tpu.dimension_semantics<parallel>], iteration_bounds = array<i64: 2>, scalar_prefetch = 0 : i64, scratch_operands = 0 : i64, tpu.core_type = #tpu.core_type<tc>, window_params = [{transform_indices = @transform_0, window_bounds = array<i64: 2, 65, 16>}, {pipeline_mode = #tpu.pipeline_mode<synchronous>, transform_indices = @transform_1, window_bounds = array<i64: 16, 128>}, {pipeline_mode = #tpu.pipeline_mode<synchronous>, transform_indices = @transform_2, window_bounds = array<i64: 65, 128>}, {transform_indices = @transform_3, window_bounds = array<i64: 2, 65, 128>}]} {
    %c0 = arith.constant 0 : index
    %c0_0 = arith.constant 0 : index
    %0 = vector.load %arg2[%c0, %c0_0] : memref<16x128xf32, #tpu.memory_space<vmem>>, vector<16x128xf32>
    %c0_1 = arith.constant 0 : index
    %c0_2 = arith.constant 0 : index
    %1 = vector.load %arg3[%c0_1, %c0_2] : memref<65x128xf32, #tpu.memory_space<vmem>>, vector<65x128xf32>
    %c0_3 = arith.constant 0 : index
    %c0_4 = arith.constant 0 : index
    %c0_5 = arith.constant 0 : index
    %2 = vector.load %arg1[%c0_3, %c0_4, %c0_5] : memref<2x65x16xf32, #tpu.memory_space<vmem>>, vector<1x65x16xf32>
    %3 = vector.shape_cast %2 : vector<1x65x16xf32> to vector<65x16xf32>
    %cst = arith.constant dense<0.000000e+00> : vector<65x128xf32>
    %4 = tpu.matmul %3, %0, %cst {dimension_numbers = #tpu.dot_dimension_numbers<[1], [0], [0], [1], [0, 0, 1, 1], [], []>} : vector<65x16xf32>, vector<16x128xf32>, vector<65x128xf32> -> vector<65x128xf32>
    %5 = arith.addf %4, %1 : vector<65x128xf32>
    %c0_6 = arith.constant 0 : index
    %c0_7 = arith.constant 0 : index
    %c0_8 = arith.constant 0 : index
    %6 = vector.load %arg4[%c0_6, %c0_7, %c0_8] : memref<2x65x128xf32, #tpu.memory_space<vmem>>, vector<1x65x128xf32>
    %7 = vector.shape_cast %6 : vector<1x65x128xf32> to vector<65x128xf32>
    %8 = vector.shape_cast %5 : vector<65x128xf32> to vector<1x65x128xf32>
    tpu.vector_store %arg4[%c0_6, %c0_7, %c0_8], %8 {strides = array<i32>} : memref<2x65x128xf32, #tpu.memory_space<vmem>>, vector<1x65x128xf32>,
    %c1 = arith.constant 1 : index
    %c0_9 = arith.constant 0 : index
    %c0_10 = arith.constant 0 : index
    %9 = vector.load %arg1[%c1, %c0_9, %c0_10] : memref<2x65x16xf32, #tpu.memory_space<vmem>>, vector<1x65x16xf32>
    %10 = vector.shape_cast %9 : vector<1x65x16xf32> to vector<65x16xf32>
    %cst_11 = arith.constant dense<0.000000e+00> : vector<65x128xf32>
    %11 = tpu.matmul %10, %0, %cst_11 {dimension_numbers = #tpu.dot_dimension_numbers<[1], [0], [0], [1], [0, 0, 1, 1], [], []>} : vector<65x16xf32>, vector<16x128xf32>, vector<65x128xf32> -> vector<65x128xf32>
    %12 = arith.addf %11, %1 : vector<65x128xf32>
    %c1_12 = arith.constant 1 : index
    %c0_13 = arith.constant 0 : index
    %c0_14 = arith.constant 0 : index
    %13 = vector.load %arg4[%c1_12, %c0_13, %c0_14] : memref<2x65x128xf32, #tpu.memory_space<vmem>>, vector<1x65x128xf32>
    %14 = vector.shape_cast %13 : vector<1x65x128xf32> to vector<65x128xf32>
    %15 = vector.shape_cast %12 : vector<65x128xf32> to vector<1x65x128xf32>
    tpu.vector_store %arg4[%c1_12, %c0_13, %c0_14], %15 {strides = array<i32>} : memref<2x65x128xf32, #tpu.memory_space<vmem>>, vector<1x65x128xf32>,
    return
  }
  func.func @transform_0(%arg0: i32) -> (i32, i32, i32) {
    %c0_i32 = arith.constant 0 : i32
    %c0_i32_0 = arith.constant 0 : i32
    %c0_i32_1 = arith.constant 0 : i32
    return %arg0, %c0_i32, %c0_i32_0 : i32, i32, i32
  }
  func.func @transform_1(%arg0: i32) -> (i32, i32) {
    %c0_i32 = arith.constant 0 : i32
    %c0_i32_0 = arith.constant 0 : i32
    %c0_i32_1 = arith.constant 0 : i32
    return %c0_i32, %c0_i32_0 : i32, i32
  }
  func.func @transform_2(%arg0: i32) -> (i32, i32) {
    %c0_i32 = arith.constant 0 : i32
    %c0_i32_0 = arith.constant 0 : i32
    %c0_i32_1 = arith.constant 0 : i32
    return %c0_i32, %c0_i32_0 : i32, i32
  }
  func.func @transform_3(%arg0: i32) -> (i32, i32, i32) {
    %c0_i32 = arith.constant 0 : i32
    %c0_i32_0 = arith.constant 0 : i32
    %c0_i32_1 = arith.constant 0 : i32
    return %arg0, %c0_i32, %c0_i32_0 : i32, i32, i32
  }
}

module attributes {stable_mosaic.version = 11 : i64} {
  func.func @_patch_embed_kernel(%arg0: i32, %arg1: memref<2x65x16xf32, #tpu.memory_space<vmem>>, %arg2: memref<16x128xf32, #tpu.memory_space<vmem>>, %arg3: memref<65x128xf32, #tpu.memory_space<vmem>>, %arg4: memref<2x65x128xf32, #tpu.memory_space<vmem>>) attributes {dimension_semantics = [#tpu.dimension_semantics<parallel>], iteration_bounds = array<i64: 2>, scalar_prefetch = 0 : i64, scratch_operands = 0 : i64, tpu.core_type = #tpu.core_type<tc>, window_params = [{transform_indices = @transform_0, window_bounds = array<i64: 2, 65, 16>}, {pipeline_mode = #tpu.pipeline_mode<synchronous>, transform_indices = @transform_1, window_bounds = array<i64: 16, 128>}, {pipeline_mode = #tpu.pipeline_mode<synchronous>, transform_indices = @transform_2, window_bounds = array<i64: 65, 128>}, {transform_indices = @transform_3, window_bounds = array<i64: 2, 65, 128>}]} {
    %c0 = arith.constant 0 : index
    %c0_0 = arith.constant 0 : index
    %0 = vector.load %arg2[%c0, %c0_0] : memref<16x128xf32, #tpu.memory_space<vmem>>, vector<16x128xf32>
    %c0_1 = arith.constant 0 : index
    %c0_2 = arith.constant 0 : index
    %1 = vector.load %arg3[%c0_1, %c0_2] : memref<65x128xf32, #tpu.memory_space<vmem>>, vector<65x128xf32>
    %c0_3 = arith.constant 0 : index
    %c0_4 = arith.constant 0 : index
    %c0_5 = arith.constant 0 : index
    %2 = vector.load %arg1[%c0_3, %c0_4, %c0_5] : memref<2x65x16xf32, #tpu.memory_space<vmem>>, vector<1x65x16xf32>
    %3 = vector.shape_cast %2 : vector<1x65x16xf32> to vector<65x16xf32>
    %cst = arith.constant dense<0.000000e+00> : vector<65x128xf32>
    %4 = tpu.matmul %3, %0, %cst {dimension_numbers = #tpu.dot_dimension_numbers<[1], [0], [0], [1], [0, 0, 1, 1], [], []>} : vector<65x16xf32>, vector<16x128xf32>, vector<65x128xf32> -> vector<65x128xf32>
    %5 = arith.addf %4, %1 : vector<65x128xf32>
    %c0_6 = arith.constant 0 : index
    %c0_7 = arith.constant 0 : index
    %c0_8 = arith.constant 0 : index
    %6 = vector.load %arg4[%c0_6, %c0_7, %c0_8] : memref<2x65x128xf32, #tpu.memory_space<vmem>>, vector<1x65x128xf32>
    %7 = vector.shape_cast %6 : vector<1x65x128xf32> to vector<65x128xf32>
    %8 = vector.shape_cast %5 : vector<65x128xf32> to vector<1x65x128xf32>
    tpu.vector_store %arg4[%c0_6, %c0_7, %c0_8], %8 {strides = array<i32>} : memref<2x65x128xf32, #tpu.memory_space<vmem>>, vector<1x65x128xf32>,
    %c1 = arith.constant 1 : index
    %c0_9 = arith.constant 0 : index
    %c0_10 = arith.constant 0 : index
    %9 = vector.load %arg1[%c1, %c0_9, %c0_10] : memref<2x65x16xf32, #tpu.memory_space<vmem>>, vector<1x65x16xf32>
    %10 = vector.shape_cast %9 : vector<1x65x16xf32> to vector<65x16xf32>
    %cst_11 = arith.constant dense<0.000000e+00> : vector<65x128xf32>
    %11 = tpu.matmul %10, %0, %cst_11 {dimension_numbers = #tpu.dot_dimension_numbers<[1], [0], [0], [1], [0, 0, 1, 1], [], []>} : vector<65x16xf32>, vector<16x128xf32>, vector<65x128xf32> -> vector<65x128xf32>
    %12 = arith.addf %11, %1 : vector<65x128xf32>
    %c1_12 = arith.constant 1 : index
    %c0_13 = arith.constant 0 : index
    %c0_14 = arith.constant 0 : index
    %13 = vector.load %arg4[%c1_12, %c0_13, %c0_14] : memref<2x65x128xf32, #tpu.memory_space<vmem>>, vector<1x65x128xf32>
    %14 = vector.shape_cast %13 : vector<1x65x128xf32> to vector<65x128xf32>
    %15 = vector.shape_cast %12 : vector<65x128xf32> to vector<1x65x128xf32>
    tpu.vector_store %arg4[%c1_12, %c0_13, %c0_14], %15 {strides = array<i32>} : memref<2x65x128xf32, #tpu.memory_space<vmem>>, vector<1x65x128xf32>,
    return
  }
  func.func @transform_0(%arg0: i32) -> (i32, i32, i32) {
    %c0_i32 = arith.constant 0 : i32
    %c0_i32_0 = arith.constant 0 : i32
    %c0_i32_1 = arith.constant 0 : i32
    return %arg0, %c0_i32, %c0_i32_0 : i32, i32, i32
  }
  func.func @transform_1(%arg0: i32) -> (i32, i32) {
    %c0_i32 = arith.constant 0 : i32
    %c0_i32_0 = arith.constant 0 : i32
    %c0_i32_1 = arith.constant 0 : i32
    return %c0_i32, %c0_i32_0 : i32, i32
  }
  func.func @transform_2(%arg0: i32) -> (i32, i32) {
    %c0_i32 = arith.constant 0 : i32
    %c0_i32_0 = arith.constant 0 : i32
    %c0_i32_1 = arith.constant 0 : i32
    return %c0_i32, %c0_i32_0 : i32, i32
  }
  func.func @transform_3(%arg0: i32) -> (i32, i32, i32) {
    %c0_i32 = arith.constant 0 : i32
    %c0_i32_0 = arith.constant 0 : i32
    %c0_i32_1 = arith.constant 0 : i32
    return %arg0, %c0_i32, %c0_i32_0 : i32, i32, i32
  }
}

</mosaic_0001>

<llo_original>
// kernel: tpu_custom_call.1
$region0: #{tpu_custom_call.1}
  #allocation0 [shape = 'u32[]', space=smem, size = 0x4, offset = 0x4, fixed_abs, tag = 'smem constant byte address 0x4 - core index']
  #allocation1 [shape = 'u32[72,128]{1,0:T(1,128)}', space=vmem, size = 0x9000, scoped, tag = 'internal scratch']
  %s0 = inlined_call_operand.vmem [shape: f32[4,65,16], index: 0, kind: input, shape index: {}]
  %s1 = inlined_call_operand.vmem [shape: f32[16,128], index: 1, kind: input, shape index: {}]
  %s2 = inlined_call_operand.vmem [shape: f32[65,128], index: 2, kind: input, shape index: {}]
  %s3 = inlined_call_operand.vmem [shape: f32[4,65,128], index: 3, kind: output, shape index: {}]
  %s4 = sld [smem:[#allocation0]]
  $region45: #{tpu_custom_call.1} parent=0
    _
  %s6 = ssub.s32 1, %s4
  %s7 = scalar_select 0, %s6, %s4
  loop: start=0, step=1, limit=4
  $region2: #{tpu_custom_call.1} parent=0 // loop_pre_header
    _
  $region3: #{tpu_custom_call.1} parent=0 // loop_header
    %s9 = sphi 0, %s13
    %p10 = scmp.ge.s32.totalorder %s9, 4
    %s19 = sphi 0, %s21
    %s22 = sphi 0, %s19
    %s23 = sphi 0, %s22
    %s39 = sphi 0, %s23
    %s43 = sphi 0, %s43
    %s45 = sphi 0, %s43
    %s46 = sphi 0, %s45
    %s60 = sphi 0, %s46
    %s64 = sphi 0, %s64
    %s66 = sphi 0, %s64
    %s67 = sphi 0, %s66
    %s81 = sphi 0, %s67
    %s87 = sphi 0, %s89
    %s90 = sphi 0, %s87
    %s91 = sphi 0, %s90
    %s107 = sphi 0, %s91
  $region4: #{tpu_custom_call.1} parent=0 // loop_header_branch
    %12 = sbr.rel (%p10) target = $region8
  $region5: #{tpu_custom_call.1} parent=0 // loop_body
    %s14 = ssub.s32 %s9, 1
    %s15 = ssub.s32 %s9, 2
    %s16 = sadd.s32 %s9, 1
    %s17 = ssub.s32 %s9, %s16
    %p18 = scmp.eq.s32.totalorder %s17, 0
    %s20 = sadd.s32 %s19, 1
    %s21 = scalar_select %p18, %s19, %s20
    %p24 = pneg %p18
    %p25 = scmp.eq.s32.totalorder %s9, 1
    %p26 = por %p24, %p25
    %p27 = scmp.ne.s32.totalorder %s19, %s22
    %p28 = scmp.eq.s32.totalorder %s9, 0
    %p29 = por %p27, %p28
    %p30 = scmp.ne.s32.totalorder %s19, %s22
    %p31 = scmp.eq.s32.totalorder %s14, 1
    %p32 = por %p30, %p31
    %p33 = scmp.ne.s32.totalorder %s22, %s23
    %p34 = scmp.eq.s32.totalorder %s14, 0
    %p35 = por %p33, %p34
    %p36 = scmp.ne.s32.totalorder %s22, %s23
    %p37 = scmp.eq.s32.totalorder %s15, 1
    %p38 = por %p36, %p37
    %p40 = scmp.ne.s32.totalorder %s23, %s39
    %p41 = scmp.eq.s32.totalorder %s15, 0
    %p42 = por %p40, %p41
    %s44 = sadd.s32 %s43, 1
    %p47 = scmp.eq.s32.totalorder %s9, 1
    %p48 = scmp.ne.s32.totalorder %s43, %s45
    %p49 = scmp.eq.s32.totalorder %s9, 0
    %p50 = por %p48, %p49
    %p51 = scmp.ne.s32.totalorder %s43, %s45
    %p52 = scmp.eq.s32.totalorder %s14, 1
    %p53 = por %p51, %p52
    %p54 = scmp.ne.s32.totalorder %s45, %s46
    %p55 = scmp.eq.s32.totalorder %s14, 0
    %p56 = por %p54, %p55
    %p57 = scmp.ne.s32.totalorder %s45, %s46
    %p58 = scmp.eq.s32.totalorder %s15, 1
    %p59 = por %p57, %p58
    %p61 = scmp.ne.s32.totalorder %s46, %s60
    %p62 = scmp.eq.s32.totalorder %s15, 0
    %p63 = por %p61, %p62
    %s65 = sadd.s32 %s64, 1
    %p68 = scmp.eq.s32.totalorder %s9, 1
    %p69 = scmp.ne.s32.totalorder %s64, %s66
    %p70 = scmp.eq.s32.totalorder %s9, 0
    %p71 = por %p69, %p70
    %p72 = scmp.ne.s32.totalorder %s64, %s66
    %p73 = scmp.eq.s32.totalorder %s14, 1
    %p74 = por %p72, %p73
    %p75 = scmp.ne.s32.totalorder %s66, %s67
    %p76 = scmp.eq.s32.totalorder %s14, 0
    %p77 = por %p75, %p76
    %p78 = scmp.ne.s32.totalorder %s66, %s67
    %p79 = scmp.eq.s32.totalorder %s15, 1
    %p80 = por %p78, %p79
    %p82 = scmp.ne.s32.totalorder %s67, %s81
    %p83 = scmp.eq.s32.totalorder %s15, 0
    %p84 = por %p82, %p83
    %s85 = ssub.s32 %s9, %s16
    %p86 = scmp.eq.s32.totalorder %s85, 0
    %s88 = sadd.s32 %s87, 1
    %s89 = scalar_select %p86, %s87, %s88
    %p92 = pneg %p86
    %p93 = scmp.eq.s32.totalorder %s9, 1
    %p94 = por %p92, %p93
    %p95 = scmp.ne.s32.totalorder %s87, %s90
    %p96 = scmp.eq.s32.totalorder %s9, 0
    %p97 = por %p95, %p96
    %p98 = scmp.ne.s32.totalorder %s87, %s90
    %p99 = scmp.eq.s32.totalorder %s14, 1
    %p100 = por %p98, %p99
    %p101 = scmp.ne.s32.totalorder %s90, %s91
    %p102 = scmp.eq.s32.totalorder %s14, 0
    %p103 = por %p101, %p102
    %p104 = scmp.ne.s32.totalorder %s90, %s91
    %p105 = scmp.eq.s32.totalorder %s15, 1
    %p106 = por %p104, %p105
    %p108 = scmp.ne.s32.totalorder %s91, %s107
    %p109 = scmp.eq.s32.totalorder %s15, 0
    %p110 = por %p108, %p109
    %p111 = scmp.le.s32.totalorder 1, %s9
    %p112 = scmp.lt.s32.totalorder %s9, 3
    %p113 = pnand %p111, %p112
    %p114 = pneg %p113
    // Predicated region
    $region9: #{tpu_custom_call.1} parent=5 // pred_check
      _
    $region10: #{tpu_custom_call.1} parent=5 // pred_check_branch
      %116 = sbr.rel (%p113) target = $region12
    $region11: #{tpu_custom_call.1} parent=5 // pred_region
      %s117 = ssub.s32 %s9, 1
      // Predicated region
      $region13: #{tpu_custom_call.1} parent=11 // pred_check
        %p118 = pneg %p56
      $region14: #{tpu_custom_call.1} parent=11 // pred_check_branch
        %120 = sbr.rel (%p118) target = $region16
      $region15: #{tpu_custom_call.1} parent=11 // pred_region
        _
      $region16: #{tpu_custom_call.1} parent=11 // pred_fallthru
        _
      // Predicated region
      $region17: #{tpu_custom_call.1} parent=11 // pred_check
        %p121 = pneg %p77
      $region18: #{tpu_custom_call.1} parent=11 // pred_check_branch
        %123 = sbr.rel (%p121) target = $region20
      $region19: #{tpu_custom_call.1} parent=11 // pred_region
        _
      $region20: #{tpu_custom_call.1} parent=11 // pred_fallthru
        _
    $region12: #{tpu_custom_call.1} parent=5 // pred_fallthru
      _
    %p124 = scmp.lt.s32.totalorder %s9, 2
    // Predicated region
    $region21: #{tpu_custom_call.1} parent=5 // pred_check
      %p125 = pneg %p124
    $region22: #{tpu_custom_call.1} parent=5 // pred_check_branch
      %127 = sbr.rel (%p125) target = $region24
    $region23: #{tpu_custom_call.1} parent=5 // pred_region
      // Predicated region
      $region25: #{tpu_custom_call.1} parent=23 // pred_check
        %p128 = pneg %p29
      $region26: #{tpu_custom_call.1} parent=23 // pred_check_branch
        %130 = sbr.rel (%p128) target = $region28
      $region27: #{tpu_custom_call.1} parent=23 // pred_region
        %s131 = smul.u32 2, %s9
        %p132 = scmp.lt.s32.totalorder %s131, 3
        %s133 = scalar_select %p132, %s131, 3
        %s134 = smul.addr %s133, 9
        %s135 = smul.addr %s134, 8
        %s136 = scalar_lea.vmem %s0, %s135
        %s137 = smul.u32 2, %s9
      $region28: #{tpu_custom_call.1} parent=23 // pred_fallthru
        _
    $region24: #{tpu_custom_call.1} parent=5 // pred_fallthru
      _
    %p138 = scmp.le.s32.totalorder 1, %s9
    %p139 = scmp.lt.s32.totalorder %s9, 3
    %p140 = pnand %p138, %p139
    %p141 = pneg %p140
    // Predicated region
    $region29: #{tpu_custom_call.1} parent=5 // pred_check
      _
    $region30: #{tpu_custom_call.1} parent=5 // pred_check_branch
      %143 = sbr.rel (%p140) target = $region32
    $region31: #{tpu_custom_call.1} parent=5 // pred_region
      %s144 = ssub.s32 %s9, 1
      %s145 = smul.u32 2, %s14
      %p146 = scmp.lt.s32.totalorder %s145, 3
      %s147 = scalar_select %p146, %s145, 3
      %s148 = smul.addr %s147, 9
      %s149 = smul.addr %s148, 8
      %s150 = scalar_lea.vmem %s0, %s149
      %p151 = pneg %p35
      %p152 = pneg %p32
      %p153 = pneg %p56
      %p154 = pneg %p53
      %p155 = pneg %p77
      %p156 = pneg %p74
      %p157 = pneg %p103
      %p158 = pneg %p100
      %s159 = smul.u32 2, %s14
      %p160 = scmp.lt.s32.totalorder %s159, 3
      %s161 = scalar_select %p160, %s159, 3
      %s162 = smul.addr %s161, 9
      %s163 = smul.addr %s162, 8
      %s164 = scalar_lea.vmem %s3, %s163
      %s165 = smul.u32 2, %s14
      %p166 = scmp.lt.s32.totalorder %s165, 3
      %s167 = scalar_select %p166, %s165, 3
      %s168 = smul.addr %s167, 9
      %s169 = smul.addr %s168, 8
      %s170 = scalar_lea.vmem %s0, %s169
      %s171 = smul.u32 2, %s14
      %s172 = smul.u32 2, %s14
      %p173 = scmp.lt.s32.totalorder %s172, 3
      %s174 = scalar_select %p173, %s172, 3
      %s175 = smul.addr %s174, 9
      %s176 = smul.addr %s175, 8
      %s177 = scalar_lea.vmem %s3, %s176
      %s178 = smul.u32 2, %s14
      %v179 = vld [vmem:[%s1] sm:$0xff]
      %v180 = vld [vmem:[%s1 + $0x8] sm:$0xff]
      %v181 = vld [vmem:[%s2] sm:$0xff]
      %v182 = vld [vmem:[%s2 + $0x8] sm:$0xff]
      %v183 = vld [vmem:[%s2 + $0x10] sm:$0xff]
      %v184 = vld [vmem:[%s2 + $0x18] sm:$0xff]
      %v185 = vld [vmem:[%s2 + $0x20] sm:$0xff]
      %v186 = vld [vmem:[%s2 + $0x28] sm:$0xff]
      %v187 = vld [vmem:[%s2 + $0x30] sm:$0xff]
      %v188 = vld [vmem:[%s2 + $0x38] sm:$0xff]
      %v189 = vld [vmem:[%s2 + $0x40] sm:$0x1]
      %v190 = vld [vmem:[%s170] sm:$0xff]
      %v191 = vld [vmem:[%s170 + $0x8] sm:$0xff]
      %v192 = vld [vmem:[%s170 + $0x10] sm:$0xff]
      %v193 = vld [vmem:[%s170 + $0x18] sm:$0xff]
      %v194 = vld [vmem:[%s170 + $0x20] sm:$0xff]
      %v195 = vld [vmem:[%s170 + $0x28] sm:$0xff]
      %v196 = vld [vmem:[%s170 + $0x30] sm:$0xff]
      %v197 = vld [vmem:[%s170 + $0x38] sm:$0xff]
      %v198 = vld [vmem:[%s170 + $0x40] sm:$0x1]
      %vm199 = vcmask 130048
      %v201 = vsel %vm199, %v190, 0
      %v204 = vsel %vm199, %v191, 0
      %v207 = vsel %vm199, %v192, 0
      %v210 = vsel %vm199, %v193, 0
      %v213 = vsel %vm199, %v194, 0
      %v216 = vsel %vm199, %v195, 0
      %v219 = vsel %vm199, %v196, 0
      %v222 = vsel %vm199, %v197, 0
      %v225 = vsel %vm199, %v198, 0
      %227 = vmatpush.msra.mxu0 0.0
      %228 = vmatpush.msra.mxu0 0.0
      %229 = vmatpush.msra.mxu0 0.0
      %230 = vmatpush.msra.mxu0 0.0
      %231 = vmatpush.msra.mxu0 0.0
      %232 = vmatpush.msra.mxu0 0.0
      %233 = vmatpush.msra.mxu0 0.0
      %234 = vmatpush.msra.mxu0 0.0
      %235 = vmatpush.msra.mxu0 0.0
      %236 = vmatpush.msra.mxu0 0.0
      %237 = vmatpush.msra.mxu0 0.0
      %238 = vmatpush.msra.mxu0 0.0
      %239 = vmatpush.msra.mxu0 0.0
      %240 = vmatpush.msra.mxu0 0.0
      %241 = vmatpush.msra.mxu0 %v180
      %242 = vmatpush.msra.mxu0 %v179
      %243 = vmatmul.f32.gmra.mxu0 %v201
      %v244 = vpop.f32.mrf.mxu0
      %v245 = vadd.f32 %v181, %v244
      %246 = vmatmul.f32.gmra.mxu0 %v204
      %v247 = vpop.f32.mrf.mxu0
      %v248 = vadd.f32 %v182, %v247
      %249 = vmatmul.f32.gmra.mxu0 %v207
      %v250 = vpop.f32.mrf.mxu0
      %v251 = vadd.f32 %v183, %v250
      %252 = vmatmul.f32.gmra.mxu0 %v210
      %v253 = vpop.f32.mrf.mxu0
      %v254 = vadd.f32 %v184, %v253
      %255 = vmatmul.f32.gmra.mxu0 %v213
      %v256 = vpop.f32.mrf.mxu0
      %v257 = vadd.f32 %v185, %v256
      %258 = vmatmul.f32.gmra.mxu0 %v216
      %v259 = vpop.f32.mrf.mxu0
      %v260 = vadd.f32 %v186, %v259
      %261 = vmatmul.f32.gmra.mxu0 %v219
      %v262 = vpop.f32.mrf.mxu0
      %v263 = vadd.f32 %v187, %v262
      %264 = vmatmul.f32.gmra.mxu0 %v222
      %v265 = vpop.f32.mrf.mxu0
      %v266 = vadd.f32 %v188, %v265
      %267 = vmatmul.f32.gmra.mxu0 %v225
      %v268 = vpop.f32.mrf.mxu0
      %v269 = vadd.f32 %v189, %v268
      %270 = vdwg.mxu0
      %271 = vst [vmem:[%s177] sm:$0xff] %v245
      %272 = vst [vmem:[%s177 + $0x8] sm:$0xff] %v248
      %273 = vst [vmem:[%s177 + $0x10] sm:$0xff] %v251
      %274 = vst [vmem:[%s177 + $0x18] sm:$0xff] %v254
      %275 = vst [vmem:[%s177 + $0x20] sm:$0xff] %v257
      %276 = vst [vmem:[%s177 + $0x28] sm:$0xff] %v260
      %277 = vst [vmem:[%s177 + $0x30] sm:$0xff] %v263
      %278 = vst [vmem:[%s177 + $0x38] sm:$0xff] %v266
      %279 = vst [vmem:[%s177 + $0x40] sm:$0x1] %v269
      %s280 = scalar_lea.vmem %s170, 72
      %v281 = vld [vmem:[%s280] sm:$0xff]
      %v282 = vld [vmem:[%s280 + $0x8] sm:$0xff]
      %v283 = vld [vmem:[%s280 + $0x10] sm:$0xff]
      %v284 = vld [vmem:[%s280 + $0x18] sm:$0xff]
      %v285 = vld [vmem:[%s280 + $0x20] sm:$0xff]
      %v286 = vld [vmem:[%s280 + $0x28] sm:$0xff]
      %v287 = vld [vmem:[%s280 + $0x30] sm:$0xff]
      %v288 = vld [vmem:[%s280 + $0x38] sm:$0xff]
      %v289 = vld [vmem:[%s280 + $0x40] sm:$0x1]
      %v291 = vsel %vm199, %v281, 0
      %v294 = vsel %vm199, %v282, 0
      %v297 = vsel %vm199, %v283, 0
      %v300 = vsel %vm199, %v284, 0
      %v303 = vsel %vm199, %v285, 0
      %v306 = vsel %vm199, %v286, 0
      %v309 = vsel %vm199, %v287, 0
      %v312 = vsel %vm199, %v288, 0
      %v315 = vsel %vm199, %v289, 0
      %317 = vmatpush.msra.mxu0 0.0
      %318 = vmatpush.msra.mxu0 0.0
      %319 = vmatpush.msra.mxu0 0.0
      %320 = vmatpush.msra.mxu0 0.0
      %321 = vmatpush.msra.mxu0 0.0
      %322 = vmatpush.msra.mxu0 0.0
      %323 = vmatpush.msra.mxu0 0.0
      %324 = vmatpush.msra.mxu0 0.0
      %325 = vmatpush.msra.mxu0 0.0
      %326 = vmatpush.msra.mxu0 0.0
      %327 = vmatpush.msra.mxu0 0.0
      %328 = vmatpush.msra.mxu0 0.0
      %329 = vmatpush.msra.mxu0 0.0
      %330 = vmatpush.msra.mxu0 0.0
      %331 = vmatpush.msra.mxu0 %v180
      %332 = vmatpush.msra.mxu0 %v179
      %333 = vmatmul.f32.gmra.mxu0 %v291
      %v334 = vpop.f32.mrf.mxu0
      %v335 = vadd.f32 %v181, %v334
      %336 = vmatmul.f32.gmra.mxu0 %v294
      %v337 = vpop.f32.mrf.mxu0
      %v338 = vadd.f32 %v182, %v337
      %339 = vmatmul.f32.gmra.mxu0 %v297
      %v340 = vpop.f32.mrf.mxu0
      %v341 = vadd.f32 %v183, %v340
      %342 = vmatmul.f32.gmra.mxu0 %v300
      %v343 = vpop.f32.mrf.mxu0
      %v344 = vadd.f32 %v184, %v343
      %345 = vmatmul.f32.gmra.mxu0 %v303
      %v346 = vpop.f32.mrf.mxu0
      %v347 = vadd.f32 %v185, %v346
      %348 = vmatmul.f32.gmra.mxu0 %v306
      %v349 = vpop.f32.mrf.mxu0
      %v350 = vadd.f32 %v186, %v349
      %351 = vmatmul.f32.gmra.mxu0 %v309
      %v352 = vpop.f32.mrf.mxu0
      %v353 = vadd.f32 %v187, %v352
      %354 = vmatmul.f32.gmra.mxu0 %v312
      %v355 = vpop.f32.mrf.mxu0
      %v356 = vadd.f32 %v188, %v355
      %357 = vmatmul.f32.gmra.mxu0 %v315
      %v358 = vpop.f32.mrf.mxu0
      %v359 = vadd.f32 %v189, %v358
      %360 = vdwg.mxu0
      %s361 = scalar_lea.vmem %s177, 72
      %362 = vst [vmem:[%s361] sm:$0xff] %v335
      %363 = vst [vmem:[%s361 + $0x8] sm:$0xff] %v338
      %364 = vst [vmem:[%s361 + $0x10] sm:$0xff] %v341
      %365 = vst [vmem:[%s361 + $0x18] sm:$0xff] %v344
      %366 = vst [vmem:[%s361 + $0x20] sm:$0xff] %v347
      %367 = vst [vmem:[%s361 + $0x28] sm:$0xff] %v350
      %368 = vst [vmem:[%s361 + $0x30] sm:$0xff] %v353
      %369 = vst [vmem:[%s361 + $0x38] sm:$0xff] %v356
      %370 = vst [vmem:[%s361 + $0x40] sm:$0x1] %v359
      %s371 = smul.u32 2, %s14
      %p372 = scmp.lt.s32.totalorder %s371, 3
      %s373 = scalar_select %p372, %s371, 3
      %s374 = smul.addr %s373, 9
      %s375 = smul.addr %s374, 8
      %s376 = scalar_lea.vmem %s3, %s375
      // Predicated region
      $region33: #{tpu_custom_call.1} parent=31 // pred_check
        %p377 = pneg %p100
      $region34: #{tpu_custom_call.1} parent=31 // pred_check_branch
        %379 = sbr.rel (%p377) target = $region36
      $region35: #{tpu_custom_call.1} parent=31 // pred_region
        %s380 = smul.u32 2, %s14
      $region36: #{tpu_custom_call.1} parent=31 // pred_fallthru
        _
    $region32: #{tpu_custom_call.1} parent=5 // pred_fallthru
      _
    %p381 = scmp.le.s32.totalorder 2, %s9
    // Predicated region
    $region37: #{tpu_custom_call.1} parent=5 // pred_check
      %p382 = pneg %p381
    $region38: #{tpu_custom_call.1} parent=5 // pred_check_branch
      %384 = sbr.rel (%p382) target = $region40
    $region39: #{tpu_custom_call.1} parent=5 // pred_region
      %s385 = ssub.s32 %s9, 2
      // Predicated region
      $region41: #{tpu_custom_call.1} parent=39 // pred_check
        %p386 = pneg %p106
      $region42: #{tpu_custom_call.1} parent=39 // pred_check_branch
        %388 = sbr.rel (%p386) target = $region44
      $region43: #{tpu_custom_call.1} parent=39 // pred_region
        %s389 = smul.u32 2, %s15
        %p390 = scmp.lt.s32.totalorder %s389, 3
        %s391 = scalar_select %p390, %s389, 3
        %s392 = smul.addr %s391, 9
        %s393 = smul.addr %s392, 8
        %s394 = scalar_lea.vmem %s3, %s393
      $region44: #{tpu_custom_call.1} parent=39 // pred_fallthru
        _
    $region40: #{tpu_custom_call.1} parent=5 // pred_fallthru
      _
  $region6: #{tpu_custom_call.1} parent=0 // loop_footer
    %s13 = sadd.s32 1, %s9
  $region7: #{tpu_custom_call.1} parent=0 // loop_footer_branch
    %8 = sbr.rel target = $region3
  $region8: #{tpu_custom_call.1} parent=0 // loop_exit
    _

// kernel: tpu_custom_call.1
$region0: #{tpu_custom_call.1}
  #allocation0 [shape = 'u32[]', space=smem, size = 0x4, offset = 0x4, fixed_abs, tag = 'smem constant byte address 0x4 - core index']
  #allocation1 [shape = 'u32[72,128]{1,0:T(1,128)}', space=vmem, size = 0x9000, scoped, tag = 'internal scratch']
  %s0 = inlined_call_operand.vmem [shape: f32[4,65,16], index: 0, kind: input, shape index: {}]
  %s1 = inlined_call_operand.vmem [shape: f32[16,128], index: 1, kind: input, shape index: {}]
  %s2 = inlined_call_operand.vmem [shape: f32[65,128], index: 2, kind: input, shape index: {}]
  %s3 = inlined_call_operand.vmem [shape: f32[4,65,128], index: 3, kind: output, shape index: {}]
  %s4 = sld [smem:[#allocation0]]
  $region45: #{tpu_custom_call.1} parent=0
    _
  %s6 = ssub.s32 1, %s4
  %s7 = scalar_select 0, %s6, %s4
  loop: start=0, step=1, limit=4
  $region2: #{tpu_custom_call.1} parent=0 // loop_pre_header
    _
  $region3: #{tpu_custom_call.1} parent=0 // loop_header
    %s9 = sphi 0, %s13
    %p10 = scmp.ge.s32.totalorder %s9, 4
    %s19 = sphi 0, %s21
    %s22 = sphi 0, %s19
    %s23 = sphi 0, %s22
    %s39 = sphi 0, %s23
    %s43 = sphi 0, %s43
    %s45 = sphi 0, %s43
    %s46 = sphi 0, %s45
    %s60 = sphi 0, %s46
    %s64 = sphi 0, %s64
    %s66 = sphi 0, %s64
    %s67 = sphi 0, %s66
    %s81 = sphi 0, %s67
    %s87 = sphi 0, %s89
    %s90 = sphi 0, %s87
    %s91 = sphi 0, %s90
    %s107 = sphi 0, %s91
  $region4: #{tpu_custom_call.1} parent=0 // loop_header_branch
    %12 = sbr.rel (%p10) target = $region8
  $region5: #{tpu_custom_call.1} parent=0 // loop_body
    %s14 = ssub.s32 %s9, 1
    %s15 = ssub.s32 %s9, 2
    %s16 = sadd.s32 %s9, 1
    %s17 = ssub.s32 %s9, %s16
    %p18 = scmp.eq.s32.totalorder %s17, 0
    %s20 = sadd.s32 %s19, 1
    %s21 = scalar_select %p18, %s19, %s20
    %p24 = pneg %p18
    %p25 = scmp.eq.s32.totalorder %s9, 1
    %p26 = por %p24, %p25
    %p27 = scmp.ne.s32.totalorder %s19, %s22
    %p28 = scmp.eq.s32.totalorder %s9, 0
    %p29 = por %p27, %p28
    %p30 = scmp.ne.s32.totalorder %s19, %s22
    %p31 = scmp.eq.s32.totalorder %s14, 1
    %p32 = por %p30, %p31
    %p33 = scmp.ne.s32.totalorder %s22, %s23
    %p34 = scmp.eq.s32.totalorder %s14, 0
    %p35 = por %p33, %p34
    %p36 = scmp.ne.s32.totalorder %s22, %s23
    %p37 = scmp.eq.s32.totalorder %s15, 1
    %p38 = por %p36, %p37
    %p40 = scmp.ne.s32.totalorder %s23, %s39
    %p41 = scmp.eq.s32.totalorder %s15, 0
    %p42 = por %p40, %p41
    %s44 = sadd.s32 %s43, 1
    %p47 = scmp.eq.s32.totalorder %s9, 1
    %p48 = scmp.ne.s32.totalorder %s43, %s45
    %p49 = scmp.eq.s32.totalorder %s9, 0
    %p50 = por %p48, %p49
    %p51 = scmp.ne.s32.totalorder %s43, %s45
    %p52 = scmp.eq.s32.totalorder %s14, 1
    %p53 = por %p51, %p52
    %p54 = scmp.ne.s32.totalorder %s45, %s46
    %p55 = scmp.eq.s32.totalorder %s14, 0
    %p56 = por %p54, %p55
    %p57 = scmp.ne.s32.totalorder %s45, %s46
    %p58 = scmp.eq.s32.totalorder %s15, 1
    %p59 = por %p57, %p58
    %p61 = scmp.ne.s32.totalorder %s46, %s60
    %p62 = scmp.eq.s32.totalorder %s15, 0
    %p63 = por %p61, %p62
    %s65 = sadd.s32 %s64, 1
    %p68 = scmp.eq.s32.totalorder %s9, 1
    %p69 = scmp.ne.s32.totalorder %s64, %s66
    %p70 = scmp.eq.s32.totalorder %s9, 0
    %p71 = por %p69, %p70
    %p72 = scmp.ne.s32.totalorder %s64, %s66
    %p73 = scmp.eq.s32.totalorder %s14, 1
    %p74 = por %p72, %p73
    %p75 = scmp.ne.s32.totalorder %s66, %s67
    %p76 = scmp.eq.s32.totalorder %s14, 0
    %p77 = por %p75, %p76
    %p78 = scmp.ne.s32.totalorder %s66, %s67
    %p79 = scmp.eq.s32.totalorder %s15, 1
    %p80 = por %p78, %p79
    %p82 = scmp.ne.s32.totalorder %s67, %s81
    %p83 = scmp.eq.s32.totalorder %s15, 0
    %p84 = por %p82, %p83
    %s85 = ssub.s32 %s9, %s16
    %p86 = scmp.eq.s32.totalorder %s85, 0
    %s88 = sadd.s32 %s87, 1
    %s89 = scalar_select %p86, %s87, %s88
    %p92 = pneg %p86
    %p93 = scmp.eq.s32.totalorder %s9, 1
    %p94 = por %p92, %p93
    %p95 = scmp.ne.s32.totalorder %s87, %s90
    %p96 = scmp.eq.s32.totalorder %s9, 0
    %p97 = por %p95, %p96
    %p98 = scmp.ne.s32.totalorder %s87, %s90
    %p99 = scmp.eq.s32.totalorder %s14, 1
    %p100 = por %p98, %p99
    %p101 = scmp.ne.s32.totalorder %s90, %s91
    %p102 = scmp.eq.s32.totalorder %s14, 0
    %p103 = por %p101, %p102
    %p104 = scmp.ne.s32.totalorder %s90, %s91
    %p105 = scmp.eq.s32.totalorder %s15, 1
    %p106 = por %p104, %p105
    %p108 = scmp.ne.s32.totalorder %s91, %s107
    %p109 = scmp.eq.s32.totalorder %s15, 0
    %p110 = por %p108, %p109
    %p111 = scmp.le.s32.totalorder 1, %s9
    %p112 = scmp.lt.s32.totalorder %s9, 3
    %p113 = pnand %p111, %p112
    %p114 = pneg %p113
    // Predicated region
    $region9: #{tpu_custom_call.1} parent=5 // pred_check
      _
    $region10: #{tpu_custom_call.1} parent=5 // pred_check_branch
      %116 = sbr.rel (%p113) target = $region12
    $region11: #{tpu_custom_call.1} parent=5 // pred_region
      %s117 = ssub.s32 %s9, 1
      // Predicated region
      $region13: #{tpu_custom_call.1} parent=11 // pred_check
        %p118 = pneg %p56
      $region14: #{tpu_custom_call.1} parent=11 // pred_check_branch
        %120 = sbr.rel (%p118) target = $region16
      $region15: #{tpu_custom_call.1} parent=11 // pred_region
        _
      $region16: #{tpu_custom_call.1} parent=11 // pred_fallthru
        _
      // Predicated region
      $region17: #{tpu_custom_call.1} parent=11 // pred_check
        %p121 = pneg %p77
      $region18: #{tpu_custom_call.1} parent=11 // pred_check_branch
        %123 = sbr.rel (%p121) target = $region20
      $region19: #{tpu_custom_call.1} parent=11 // pred_region
        _
      $region20: #{tpu_custom_call.1} parent=11 // pred_fallthru
        _
    $region12: #{tpu_custom_call.1} parent=5 // pred_fallthru
      _
    %p124 = scmp.lt.s32.totalorder %s9, 2
    // Predicated region
    $region21: #{tpu_custom_call.1} parent=5 // pred_check
      %p125 = pneg %p124
    $region22: #{tpu_custom_call.1} parent=5 // pred_check_branch
      %127 = sbr.rel (%p125) target = $region24
    $region23: #{tpu_custom_call.1} parent=5 // pred_region
      // Predicated region
      $region25: #{tpu_custom_call.1} parent=23 // pred_check
        %p128 = pneg %p29
      $region26: #{tpu_custom_call.1} parent=23 // pred_check_branch
        %130 = sbr.rel (%p128) target = $region28
      $region27: #{tpu_custom_call.1} parent=23 // pred_region
        %s131 = smul.u32 2, %s9
        %p132 = scmp.lt.s32.totalorder %s131, 3
        %s133 = scalar_select %p132, %s131, 3
        %s134 = smul.addr %s133, 9
        %s135 = smul.addr %s134, 8
        %s136 = scalar_lea.vmem %s0, %s135
        %s137 = smul.u32 2, %s9
      $region28: #{tpu_custom_call.1} parent=23 // pred_fallthru
        _
    $region24: #{tpu_custom_call.1} parent=5 // pred_fallthru
      _
    %p138 = scmp.le.s32.totalorder 1, %s9
    %p139 = scmp.lt.s32.totalorder %s9, 3
    %p140 = pnand %p138, %p139
    %p141 = pneg %p140
    // Predicated region
    $region29: #{tpu_custom_call.1} parent=5 // pred_check
      _
    $region30: #{tpu_custom_call.1} parent=5 // pred_check_branch
      %143 = sbr.rel (%p140) target = $region32
    $region31: #{tpu_custom_call.1} parent=5 // pred_region
      %s144 = ssub.s32 %s9, 1
      %s145 = smul.u32 2, %s14
      %p146 = scmp.lt.s32.totalorder %s145, 3
      %s147 = scalar_select %p146, %s145, 3
      %s148 = smul.addr %s147, 9
      %s149 = smul.addr %s148, 8
      %s150 = scalar_lea.vmem %s0, %s149
      %p151 = pneg %p35
      %p152 = pneg %p32
      %p153 = pneg %p56
      %p154 = pneg %p53
      %p155 = pneg %p77
      %p156 = pneg %p74
      %p157 = pneg %p103
      %p158 = pneg %p100
      %s159 = smul.u32 2, %s14
      %p160 = scmp.lt.s32.totalorder %s159, 3
      %s161 = scalar_select %p160, %s159, 3
      %s162 = smul.addr %s161, 9
      %s163 = smul.addr %s162, 8
      %s164 = scalar_lea.vmem %s3, %s163
      %s165 = smul.u32 2, %s14
      %p166 = scmp.lt.s32.totalorder %s165, 3
      %s167 = scalar_select %p166, %s165, 3
      %s168 = smul.addr %s167, 9
      %s169 = smul.addr %s168, 8
      %s170 = scalar_lea.vmem %s0, %s169
      %s171 = smul.u32 2, %s14
      %s172 = smul.u32 2, %s14
      %p173 = scmp.lt.s32.totalorder %s172, 3
      %s174 = scalar_select %p173, %s172, 3
      %s175 = smul.addr %s174, 9
      %s176 = smul.addr %s175, 8
      %s177 = scalar_lea.vmem %s3, %s176
      %s178 = smul.u32 2, %s14
      %v179 = vld [vmem:[%s1] sm:$0xff]
      %v180 = vld [vmem:[%s1 + $0x8] sm:$0xff]
      %v181 = vld [vmem:[%s2] sm:$0xff]
      %v182 = vld [vmem:[%s2 + $0x8] sm:$0xff]
      %v183 = vld [vmem:[%s2 + $0x10] sm:$0xff]
      %v184 = vld [vmem:[%s2 + $0x18] sm:$0xff]
      %v185 = vld [vmem:[%s2 + $0x20] sm:$0xff]
      %v186 = vld [vmem:[%s2 + $0x28] sm:$0xff]
      %v187 = vld [vmem:[%s2 + $0x30] sm:$0xff]
      %v188 = vld [vmem:[%s2 + $0x38] sm:$0xff]
      %v189 = vld [vmem:[%s2 + $0x40] sm:$0x1]
      %v190 = vld [vmem:[%s170] sm:$0xff]
      %v191 = vld [vmem:[%s170 + $0x8] sm:$0xff]
      %v192 = vld [vmem:[%s170 + $0x10] sm:$0xff]
      %v193 = vld [vmem:[%s170 + $0x18] sm:$0xff]
      %v194 = vld [vmem:[%s170 + $0x20] sm:$0xff]
      %v195 = vld [vmem:[%s170 + $0x28] sm:$0xff]
      %v196 = vld [vmem:[%s170 + $0x30] sm:$0xff]
      %v197 = vld [vmem:[%s170 + $0x38] sm:$0xff]
      %v198 = vld [vmem:[%s170 + $0x40] sm:$0x1]
      %vm199 = vcmask 130048
      %v201 = vsel %vm199, %v190, 0
      %v204 = vsel %vm199, %v191, 0
      %v207 = vsel %vm199, %v192, 0
      %v210 = vsel %vm199, %v193, 0
      %v213 = vsel %vm199, %v194, 0
      %v216 = vsel %vm199, %v195, 0
      %v219 = vsel %vm199, %v196, 0
      %v222 = vsel %vm199, %v197, 0
      %v225 = vsel %vm199, %v198, 0
      %227 = vmatpush.msra.mxu0 0.0
      %228 = vmatpush.msra.mxu0 0.0
      %229 = vmatpush.msra.mxu0 0.0
      %230 = vmatpush.msra.mxu0 0.0
      %231 = vmatpush.msra.mxu0 0.0
      %232 = vmatpush.msra.mxu0 0.0
      %233 = vmatpush.msra.mxu0 0.0
      %234 = vmatpush.msra.mxu0 0.0
      %235 = vmatpush.msra.mxu0 0.0
      %236 = vmatpush.msra.mxu0 0.0
      %237 = vmatpush.msra.mxu0 0.0
      %238 = vmatpush.msra.mxu0 0.0
      %239 = vmatpush.msra.mxu0 0.0
      %240 = vmatpush.msra.mxu0 0.0
      %241 = vmatpush.msra.mxu0 %v180
      %242 = vmatpush.msra.mxu0 %v179
      %243 = vmatmul.f32.gmra.mxu0 %v201
      %v244 = vpop.f32.mrf.mxu0
      %v245 = vadd.f32 %v181, %v244
      %246 = vmatmul.f32.gmra.mxu0 %v204
      %v247 = vpop.f32.mrf.mxu0
      %v248 = vadd.f32 %v182, %v247
      %249 = vmatmul.f32.gmra.mxu0 %v207
      %v250 = vpop.f32.mrf.mxu0
      %v251 = vadd.f32 %v183, %v250
      %252 = vmatmul.f32.gmra.mxu0 %v210
      %v253 = vpop.f32.mrf.mxu0
      %v254 = vadd.f32 %v184, %v253
      %255 = vmatmul.f32.gmra.mxu0 %v213
      %v256 = vpop.f32.mrf.mxu0
      %v257 = vadd.f32 %v185, %v256
      %258 = vmatmul.f32.gmra.mxu0 %v216
      %v259 = vpop.f32.mrf.mxu0
      %v260 = vadd.f32 %v186, %v259
      %261 = vmatmul.f32.gmra.mxu0 %v219
      %v262 = vpop.f32.mrf.mxu0
      %v263 = vadd.f32 %v187, %v262
      %264 = vmatmul.f32.gmra.mxu0 %v222
      %v265 = vpop.f32.mrf.mxu0
      %v266 = vadd.f32 %v188, %v265
      %267 = vmatmul.f32.gmra.mxu0 %v225
      %v268 = vpop.f32.mrf.mxu0
      %v269 = vadd.f32 %v189, %v268
      %270 = vdwg.mxu0
      %271 = vst [vmem:[%s177] sm:$0xff] %v245
      %272 = vst [vmem:[%s177 + $0x8] sm:$0xff] %v248
      %273 = vst [vmem:[%s177 + $0x10] sm:$0xff] %v251
      %274 = vst [vmem:[%s177 + $0x18] sm:$0xff] %v254
      %275 = vst [vmem:[%s177 + $0x20] sm:$0xff] %v257
      %276 = vst [vmem:[%s177 + $0x28] sm:$0xff] %v260
      %277 = vst [vmem:[%s177 + $0x30] sm:$0xff] %v263
      %278 = vst [vmem:[%s177 + $0x38] sm:$0xff] %v266
      %279 = vst [vmem:[%s177 + $0x40] sm:$0x1] %v269
      %s280 = scalar_lea.vmem %s170, 72
      %v281 = vld [vmem:[%s280] sm:$0xff]
      %v282 = vld [vmem:[%s280 + $0x8] sm:$0xff]
      %v283 = vld [vmem:[%s280 + $0x10] sm:$0xff]
      %v284 = vld [vmem:[%s280 + $0x18] sm:$0xff]
      %v285 = vld [vmem:[%s280 + $0x20] sm:$0xff]
      %v286 = vld [vmem:[%s280 + $0x28] sm:$0xff]
      %v287 = vld [vmem:[%s280 + $0x30] sm:$0xff]
      %v288 = vld [vmem:[%s280 + $0x38] sm:$0xff]
      %v289 = vld [vmem:[%s280 + $0x40] sm:$0x1]
      %v291 = vsel %vm199, %v281, 0
      %v294 = vsel %vm199, %v282, 0
      %v297 = vsel %vm199, %v283, 0
      %v300 = vsel %vm199, %v284, 0
      %v303 = vsel %vm199, %v285, 0
      %v306 = vsel %vm199, %v286, 0
      %v309 = vsel %vm199, %v287, 0
      %v312 = vsel %vm199, %v288, 0
      %v315 = vsel %vm199, %v289, 0
      %317 = vmatpush.msra.mxu0 0.0
      %318 = vmatpush.msra.mxu0 0.0
      %319 = vmatpush.msra.mxu0 0.0
      %320 = vmatpush.msra.mxu0 0.0
      %321 = vmatpush.msra.mxu0 0.0
      %322 = vmatpush.msra.mxu0 0.0
      %323 = vmatpush.msra.mxu0 0.0
      %324 = vmatpush.msra.mxu0 0.0
      %325 = vmatpush.msra.mxu0 0.0
      %326 = vmatpush.msra.mxu0 0.0
      %327 = vmatpush.msra.mxu0 0.0
      %328 = vmatpush.msra.mxu0 0.0
      %329 = vmatpush.msra.mxu0 0.0
      %330 = vmatpush.msra.mxu0 0.0
      %331 = vmatpush.msra.mxu0 %v180
      %332 = vmatpush.msra.mxu0 %v179
      %333 = vmatmul.f32.gmra.mxu0 %v291
      %v334 = vpop.f32.mrf.mxu0
      %v335 = vadd.f32 %v181, %v334
      %336 = vmatmul.f32.gmra.mxu0 %v294
      %v337 = vpop.f32.mrf.mxu0
      %v338 = vadd.f32 %v182, %v337
      %339 = vmatmul.f32.gmra.mxu0 %v297
      %v340 = vpop.f32.mrf.mxu0
      %v341 = vadd.f32 %v183, %v340
      %342 = vmatmul.f32.gmra.mxu0 %v300
      %v343 = vpop.f32.mrf.mxu0
      %v344 = vadd.f32 %v184, %v343
      %345 = vmatmul.f32.gmra.mxu0 %v303
      %v346 = vpop.f32.mrf.mxu0
      %v347 = vadd.f32 %v185, %v346
      %348 = vmatmul.f32.gmra.mxu0 %v306
      %v349 = vpop.f32.mrf.mxu0
      %v350 = vadd.f32 %v186, %v349
      %351 = vmatmul.f32.gmra.mxu0 %v309
      %v352 = vpop.f32.mrf.mxu0
      %v353 = vadd.f32 %v187, %v352
      %354 = vmatmul.f32.gmra.mxu0 %v312
      %v355 = vpop.f32.mrf.mxu0
      %v356 = vadd.f32 %v188, %v355
      %357 = vmatmul.f32.gmra.mxu0 %v315
      %v358 = vpop.f32.mrf.mxu0
      %v359 = vadd.f32 %v189, %v358
      %360 = vdwg.mxu0
      %s361 = scalar_lea.vmem %s177, 72
      %362 = vst [vmem:[%s361] sm:$0xff] %v335
      %363 = vst [vmem:[%s361 + $0x8] sm:$0xff] %v338
      %364 = vst [vmem:[%s361 + $0x10] sm:$0xff] %v341
      %365 = vst [vmem:[%s361 + $0x18] sm:$0xff] %v344
      %366 = vst [vmem:[%s361 + $0x20] sm:$0xff] %v347
      %367 = vst [vmem:[%s361 + $0x28] sm:$0xff] %v350
      %368 = vst [vmem:[%s361 + $0x30] sm:$0xff] %v353
      %369 = vst [vmem:[%s361 + $0x38] sm:$0xff] %v356
      %370 = vst [vmem:[%s361 + $0x40] sm:$0x1] %v359
      %s371 = smul.u32 2, %s14
      %p372 = scmp.lt.s32.totalorder %s371, 3
      %s373 = scalar_select %p372, %s371, 3
      %s374 = smul.addr %s373, 9
      %s375 = smul.addr %s374, 8
      %s376 = scalar_lea.vmem %s3, %s375
      // Predicated region
      $region33: #{tpu_custom_call.1} parent=31 // pred_check
        %p377 = pneg %p100
      $region34: #{tpu_custom_call.1} parent=31 // pred_check_branch
        %379 = sbr.rel (%p377) target = $region36
      $region35: #{tpu_custom_call.1} parent=31 // pred_region
        %s380 = smul.u32 2, %s14
      $region36: #{tpu_custom_call.1} parent=31 // pred_fallthru
        _
    $region32: #{tpu_custom_call.1} parent=5 // pred_fallthru
      _
    %p381 = scmp.le.s32.totalorder 2, %s9
    // Predicated region
    $region37: #{tpu_custom_call.1} parent=5 // pred_check
      %p382 = pneg %p381
    $region38: #{tpu_custom_call.1} parent=5 // pred_check_branch
      %384 = sbr.rel (%p382) target = $region40
    $region39: #{tpu_custom_call.1} parent=5 // pred_region
      %s385 = ssub.s32 %s9, 2
      // Predicated region
      $region41: #{tpu_custom_call.1} parent=39 // pred_check
        %p386 = pneg %p106
      $region42: #{tpu_custom_call.1} parent=39 // pred_check_branch
        %388 = sbr.rel (%p386) target = $region44
      $region43: #{tpu_custom_call.1} parent=39 // pred_region
        %s389 = smul.u32 2, %s15
        %p390 = scmp.lt.s32.totalorder %s389, 3
        %s391 = scalar_select %p390, %s389, 3
        %s392 = smul.addr %s391, 9
        %s393 = smul.addr %s392, 8
        %s394 = scalar_lea.vmem %s3, %s393
      $region44: #{tpu_custom_call.1} parent=39 // pred_fallthru
        _
    $region40: #{tpu_custom_call.1} parent=5 // pred_fallthru
      _
  $region6: #{tpu_custom_call.1} parent=0 // loop_footer
    %s13 = sadd.s32 1, %s9
  $region7: #{tpu_custom_call.1} parent=0 // loop_footer_branch
    %8 = sbr.rel target = $region3
  $region8: #{tpu_custom_call.1} parent=0 // loop_exit
    _

</llo_original>
